<compile_context>
chip_gen: v7x
topology: tpu7x:2x2x1
jax: 0.10.0
libtpu: 0.0.40
codegen_flags: <defaults>
</compile_context>

<pallas_src>
import functools

import jax
import jax.numpy as jnp
from jax.experimental import pallas as pl
from jax.experimental.pallas import tpu as pltpu


def _round_up(x, m):
    return (x + m - 1) // m * m


def _cdiv(a, b):
    return (a + b - 1) // b


def _vmem_capacity_bytes():
    """Physical VMEM of the attached TPU; fallback 64 MiB (v7x, the smallest)."""
    try:
        info = pltpu.get_tpu_info()
        cap = getattr(info, "vmem_capacity_bytes", None)
        if cap:
            return int(cap)
    except Exception:
        pass
    return 64 * 1024 * 1024


def _tile_footprint_bytes(tm, k, tn, in_bytes, out_bytes):
    # Pallas double-buffers every operand/output block.
    return 2 * (tm * k * in_bytes + k * tn * in_bytes + tn * 4 + tm * tn * out_bytes)


def _pick_tn(e_pad, k_pad, tm, in_bytes, out_bytes, budget):
    """Full-width N unless the VMEM byte budget is actually exceeded.

    Each extra N tile re-reads the whole (M, K) patch matrix from HBM, so N
    tiling is a last resort.  When it triggers, prefer 512-multiples (two full
    passes of the 256-wide v6e/v7x MXU) before 128-multiples.
    """
    def fits(tn):
        return _tile_footprint_bytes(tm, k_pad, tn, in_bytes, out_bytes) <= budget

    if fits(e_pad):
        return e_pad
    for step in (512, 128):
        start = (e_pad // step) * step
        for cand in range(start, step - 1, -step):
            if e_pad % cand == 0 and fits(cand):
                return cand
    return 128


def _patch_embed_kernel(x_ref, w_ref, b_ref, o_ref):
    # x_ref: (tm, Kp)  patch-row tile (compute dtype, e.g. bf16)
    # w_ref: (Kp, tn)  projection weight tile (compute dtype), resident across
    #                  the inner row loop (constant block index)
    # b_ref: (1, tn)   bias tile (f32)
    # o_ref: (tm, tn)  output tile
    acc = jnp.dot(x_ref[...], w_ref[...], preferred_element_type=jnp.float32)
    o_ref[...] = (acc + b_ref[...]).astype(o_ref.dtype)


def patch_embedding_pallas(x_nchw, weight, bias, *, patch_size, tm=None,
                           compute_dtype=jnp.bfloat16, out_dtype=None):
    """Forward pass of PatchEmbedding (Conv2d stride=P + flatten + transpose).

    Args:
      x_nchw: (B, C, H, W) input (PyTorch NCHW convention).
      weight: (E, C, P, P) conv weight (PyTorch Conv2d layout).
      bias:   (E,) conv bias.
      patch_size: P.
      tm: row tile; default is generation-aware (1024 on 128 MiB-VMEM chips,
          512 on 64 MiB v7x).
      compute_dtype: dtype fed to the MXU (accumulation always f32).
          NOTE: compute_dtype=jnp.float32 is validation-only on v5e — its MXU
          peak is bf16 and f32 runs multi-pass while doubling HBM traffic.
      out_dtype: output dtype; default preserves x's dtype.  Pass jnp.bfloat16
          if the downstream model runs in bf16 (halves output HBM traffic).
    Returns:
      (B, num_patches, E) embeddings, matching PyTorch forward semantics.
    """
    B, C, H, W = x_nchw.shape
    E = weight.shape[0]
    P = patch_size
    assert H % P == 0 and W % P == 0
    hp, wp = H // P, W // P
    num_patches = hp * wp
    K = C * P * P
    M = B * num_patches
    out_dtype = x_nchw.dtype if out_dtype is None else out_dtype

    in_bytes = jnp.dtype(compute_dtype).itemsize
    out_bytes = jnp.dtype(out_dtype).itemsize
    sub = 8 if in_bytes >= 4 else 16

    # Lane-aligned contraction / embed dims.
    k_pad = _round_up(K, 128)
    e_pad = _round_up(E, 128)

    # --- patch extraction glue (XLA side). The transpose keeps the innermost
    #     (pw) axis in place; the compute-dtype cast and the K zero-pad are
    #     folded into the same producer so there is at most one extra pass
    #     over x, and allow_input_fusion lets XLA fuse it into the pallas
    #     operand where possible.
    patches = x_nchw.reshape(B, C, hp, P, wp, P)
    patches = patches.transpose(0, 2, 4, 1, 3, 5)        # (B, hp, wp, C, P, P)
    patches = patches.reshape(M, K).astype(compute_dtype)
    if k_pad != K:
        patches = jnp.pad(patches, ((0, 0), (0, k_pad - K)))

    # Conv weight (E, C, P, P) -> (K, E) so that patches @ w == conv output.
    w_mat = weight.reshape(E, K).T.astype(compute_dtype)
    b_mat = bias.reshape(1, E).astype(jnp.float32)
    if k_pad != K:
        w_mat = jnp.pad(w_mat, ((0, k_pad - K), (0, 0)))
    if e_pad != E:
        w_mat = jnp.pad(w_mat, ((0, 0), (0, e_pad - E)))
        b_mat = jnp.pad(b_mat, ((0, 0), (0, e_pad - E)))

    # --- tiling -----------------------------------------------------------
    vmem_cap = _vmem_capacity_bytes()
    budget = vmem_cap // 3                      # headroom for surrounding fusions
    if tm is None:
        tm = 1024 if vmem_cap >= 96 * 1024 * 1024 else 512

    tm_eff = max(sub, min(_round_up(tm, sub), _round_up(M, sub)))
    tn = _pick_tn(e_pad, k_pad, tm_eff, in_bytes, out_bytes, budget)
    # If even the chosen tn over-shoots the budget (huge K), shrink the row tile.
    while (_tile_footprint_bytes(tm_eff, k_pad, tn, in_bytes, out_bytes) > budget
           and tm_eff > sub):
        tm_eff = max(sub, _round_up(tm_eff // 2, sub))

    n_tiles_n = e_pad // tn
    # v7x has 2 TensorCores: when E is untiled, make sure small-M launches
    # still have >= 2 parallel row tiles so both cores get work.
    if n_tiles_n < 2 and M > sub and _cdiv(M, tm_eff) < 2:
        tm_eff = max(sub, _round_up(_cdiv(M, 2), sub))

    n_tiles_m = _cdiv(M, tm_eff)                # ragged grid: no jnp.pad over M

    footprint = _tile_footprint_bytes(tm_eff, k_pad, tn, in_bytes, out_bytes)
    vmem_limit = int(min(max(2 * footprint + (2 << 20), 16 << 20),
                         (vmem_cap * 3) // 4))

    # N tiles outer, row tiles inner: weight/bias block indices are constant
    # across the inner row loop, so Pallas does not re-DMA them.
    grid = (n_tiles_n, n_tiles_m)

    out = pl.pallas_call(
        _patch_embed_kernel,
        out_shape=jax.ShapeDtypeStruct((M, e_pad), out_dtype),
        grid_spec=pltpu.PrefetchScalarGridSpec(
            num_scalar_prefetch=0,
            grid=grid,
            in_specs=[
                pl.BlockSpec((tm_eff, k_pad), lambda j, i: (i, 0)),
                pl.BlockSpec((k_pad, tn), lambda j, i: (0, j)),
                pl.BlockSpec((1, tn), lambda j, i: (0, j)),
            ],
            out_specs=pl.BlockSpec((tm_eff, tn), lambda j, i: (i, j)),
        ),
        compiler_params=pltpu.CompilerParams(
            dimension_semantics=("parallel", "parallel"),
            vmem_limit_bytes=vmem_limit,
            allow_input_fusion=[True, True, True],
        ),
    )(patches, w_mat, b_mat)

    if e_pad != E:
        out = out[:, :E]
    return out.reshape(B, num_patches, E)


def _reference(x_nchw, weight, bias, patch_size):
    """Pure-JAX reference identical to PyTorch Conv2d(stride=P) + flatten + transpose."""
    out = jax.lax.conv_general_dilated(
        x_nchw, weight,
        window_strides=(patch_size, patch_size),
        padding="VALID",
        dimension_numbers=("NCHW", "OIHW", "NCHW"),
    ) + bias.reshape(1, -1, 1, 1)
    B, E, hp, wp = out.shape
    return out.reshape(B, E, hp * wp).transpose(0, 2, 1)


def _check(B, C, H, W, P, E, seed=0):
    key = jax.random.PRNGKey(seed)
    kx, kw, kb = jax.random.split(key, 3)
    x = jax.random.normal(kx, (B, C, H, W), dtype=jnp.float32)
    weight = jax.random.normal(kw, (E, C, P, P), dtype=jnp.float32) * 0.02
    bias = jax.random.normal(kb, (E,), dtype=jnp.float32) * 0.02

    ref = _reference(x, weight, bias, P)

    # bf16 MXU path (default): loose tolerance.
    fwd_bf16 = jax.jit(functools.partial(
        patch_embedding_pallas, patch_size=P, compute_dtype=jnp.bfloat16))
    out_bf16 = fwd_bf16(x, weight, bias)
    jax.block_until_ready(out_bf16)
    assert out_bf16.shape == (B, (H // P) * (W // P), E), out_bf16.shape
    assert jnp.allclose(out_bf16, ref, atol=2e-2, rtol=2e-2), float(
        jnp.max(jnp.abs(out_bf16 - ref)))

    # f32 path: tight tolerance (verifies exact semantics).
    fwd_f32 = jax.jit(functools.partial(
        patch_embedding_pallas, patch_size=P, compute_dtype=jnp.float32))
    out_f32 = fwd_f32(x, weight, bias)
    jax.block_until_ready(out_f32)
    assert jnp.allclose(out_f32, ref, atol=1e-4, rtol=1e-4), float(
        jnp.max(jnp.abs(out_f32 - ref)))


if __name__ == "__main__":
    # Small shapes consistent with the module: img=16, patch=4, C=4, E=32.
    _check(B=2, C=4, H=16, W=16, P=4, E=32)
    # Uneven M (B*num_patches=18): exercises the ragged row grid + K/E padding.
    _check(B=2, C=4, H=12, W=12, P=4, E=32, seed=1)

    # bf16-output fast path (for bf16 downstream models): smoke + loose check.
    key = jax.random.PRNGKey(0)
    kx, kw, kb = jax.random.split(key, 3)
    x = jax.random.normal(kx, (2, 4, 16, 16), dtype=jnp.float32)
    w = jax.random.normal(kw, (32, 4, 4, 4), dtype=jnp.float32) * 0.02
    b = jax.random.normal(kb, (32,), dtype=jnp.float32) * 0.02
    out_bf16 = jax.jit(functools.partial(
        patch_embedding_pallas, patch_size=4, out_dtype=jnp.bfloat16))(x, w, b)
    jax.block_until_ready(out_bf16)
    assert out_bf16.dtype == jnp.bfloat16
    assert jnp.allclose(out_bf16.astype(jnp.float32), _reference(x, w, b, 4),
                        atol=3e-2, rtol=3e-2)
    print("KERNEL_OK")
</pallas_src>

<mosaic_0001>
module attributes {stable_mosaic.version = 11 : i64} {
  func.func @_patch_embed_kernel(%arg0: i32, %arg1: i32, %arg2: memref<16x128xbf16, #tpu.memory_space<vmem>>, %arg3: memref<128x128xbf16, #tpu.memory_space<vmem>>, %arg4: memref<1x128xf32, #tpu.memory_space<vmem>>, %arg5: memref<16x128xf32, #tpu.memory_space<vmem>>) attributes {dimension_semantics = [#tpu.dimension_semantics<parallel>, #tpu.dimension_semantics<parallel>], iteration_bounds = array<i64: 1, 2>, scalar_prefetch = 0 : i64, scratch_operands = 0 : i64, tpu.core_type = #tpu.core_type<tc>, window_params = [{transform_indices = @transform_0, window_bounds = array<i64: 16, 128>}, {transform_indices = @transform_1, window_bounds = array<i64: 128, 128>}, {transform_indices = @transform_2, window_bounds = array<i64: 1, 128>}, {transform_indices = @transform_3, window_bounds = array<i64: 16, 128>}]} {
    %c0 = arith.constant 0 : index
    %c0_0 = arith.constant 0 : index
    %0 = vector.load %arg2[%c0, %c0_0] : memref<16x128xbf16, #tpu.memory_space<vmem>>, vector<16x128xbf16>
    %c0_1 = arith.constant 0 : index
    %c0_2 = arith.constant 0 : index
    %1 = vector.load %arg3[%c0_1, %c0_2] : memref<128x128xbf16, #tpu.memory_space<vmem>>, vector<128x128xbf16>
    %cst = arith.constant dense<0.000000e+00> : vector<16x128xf32>
    %2 = tpu.matmul %0, %1, %cst {dimension_numbers = #tpu.dot_dimension_numbers<[1], [0], [0], [1], [0, 0, 1, 1], [], []>} : vector<16x128xbf16>, vector<128x128xbf16>, vector<16x128xf32> -> vector<16x128xf32>
    %c0_3 = arith.constant 0 : index
    %c0_4 = arith.constant 0 : index
    %3 = vector.load %arg4[%c0_3, %c0_4] : memref<1x128xf32, #tpu.memory_space<vmem>>, vector<1x128xf32>
    %4 = vector.broadcast %3 : vector<1x128xf32> to vector<16x128xf32>
    %5 = arith.addf %2, %4 : vector<16x128xf32>
    %c0_5 = arith.constant 0 : index
    %c0_6 = arith.constant 0 : index
    %6 = vector.load %arg5[%c0_5, %c0_6] : memref<16x128xf32, #tpu.memory_space<vmem>>, vector<16x128xf32>
    tpu.vector_store %arg5[%c0_5, %c0_6], %5 {strides = array<i32>} : memref<16x128xf32, #tpu.memory_space<vmem>>, vector<16x128xf32>,
    return
  }
  func.func @transform_0(%arg0: i32, %arg1: i32) -> (i32, i32) {
    %c0_i32 = arith.constant 0 : i32
    %c0_i32_0 = arith.constant 0 : i32
    return %arg1, %c0_i32 : i32, i32
  }
  func.func @transform_1(%arg0: i32, %arg1: i32) -> (i32, i32) {
    %c0_i32 = arith.constant 0 : i32
    %c0_i32_0 = arith.constant 0 : i32
    return %c0_i32, %arg0 : i32, i32
  }
  func.func @transform_2(%arg0: i32, %arg1: i32) -> (i32, i32) {
    %c0_i32 = arith.constant 0 : i32
    %c0_i32_0 = arith.constant 0 : i32
    return %c0_i32, %arg0 : i32, i32
  }
  func.func @transform_3(%arg0: i32, %arg1: i32) -> (i32, i32) {
    %c0_i32 = arith.constant 0 : i32
    return %arg1, %arg0 : i32, i32
  }
}

</mosaic_0001>

<llo_original>
// kernel: patch_embedding_pallas.2
$region0: #{patch_embedding_pallas.2}
  #allocation0 [shape = 'u32[]', space=smem, size = 0x4, offset = 0x4, fixed_abs, tag = 'smem constant byte address 0x4 - core index']
  #allocation1 [shape = 'u32[144,128]{1,0:T(1,128)}', space=vmem, size = 0x12000, scoped, tag = 'internal scratch']
  #allocation2 [shape = 'u32[2048]{0}', space=vmem, size = 0x2000, scoped, tag = 'scoped memory for patch_embedding_pallas.2']
  #allocation3 [shape = 'u32[2048]{0}', space=vmem, size = 0x2000, scoped, tag = 'scoped memory for patch_embedding_pallas.2']
  #allocation4 [shape = 'u32[2048]{0}', space=vmem, size = 0x2000, scoped, tag = 'scoped memory for patch_embedding_pallas.2']
  #allocation5 [shape = 'u32[2048]{0}', space=vmem, size = 0x2000, scoped, tag = 'scoped memory for patch_embedding_pallas.2']
  #allocation6 [shape = 'u32[2048]{0}', space=vmem, size = 0x2000, scoped, tag = 'scoped memory for patch_embedding_pallas.2']
  #allocation7 [shape = 'u32[2048]{0}', space=vmem, size = 0x2000, scoped, tag = 'scoped memory for patch_embedding_pallas.2']
  #allocation8 [shape = 'u32[2048]{0}', space=vmem, size = 0x2000, scoped, tag = 'scoped memory for patch_embedding_pallas.2']
  #allocation9 [shape = 'u32[2048]{0}', space=vmem, size = 0x2000, scoped, tag = 'scoped memory for patch_embedding_pallas.2']
  #allocation10 [shape = 'u32[2048]{0}', space=vmem, size = 0x2000, scoped, tag = 'scoped memory for patch_embedding_pallas.2']
  #allocation11 [shape = 'u32[2048]{0}', space=vmem, size = 0x2000, scoped, tag = 'scoped memory for patch_embedding_pallas.2']
  #allocation12 [shape = 'u32[2048]{0}', space=vmem, size = 0x2000, scoped, tag = 'scoped memory for patch_embedding_pallas.2']
  #allocation13 [shape = 'u32[2048]{0}', space=vmem, size = 0x2000, scoped, tag = 'scoped memory for patch_embedding_pallas.2']
  #allocation14 [shape = 'u32[2048]{0}', space=vmem, size = 0x2000, scoped, tag = 'scoped memory for patch_embedding_pallas.2']
  #allocation15 [shape = 'u32[2048]{0}', space=vmem, size = 0x2000, scoped, tag = 'scoped memory for patch_embedding_pallas.2']
  #allocation16 [shape = 'u32[2048]{0}', space=vmem, size = 0x2000, scoped, tag = 'scoped memory for patch_embedding_pallas.2']
  %s0 = inlined_call_operand.vmem [shape: bf16[64,32], index: 0, kind: input, shape index: {}]
  %s1 = inlined_call_operand.<no memory space> [shape: bf16[], index: 1, kind: input, shape index: {}]
  %s2 = inlined_call_operand.vmem [shape: bf16[32,64], index: 2, kind: input, shape index: {}]
  %s3 = inlined_call_operand.vmem [shape: f32[1,32], index: 3, kind: input, shape index: {}]
  %s4 = inlined_call_operand.<no memory space> [shape: f32[], index: 4, kind: input, shape index: {}]
  %s5 = inlined_call_operand.hbm [shape: f32[32,128], index: 5, kind: output, shape index: {}]
  %s6 = sld [smem:[#allocation0]]
  $region45: #{patch_embedding_pallas.2} parent=0
    _
  %s8 = ssub.s32 1, %s6
  %s9 = scalar_select 0, %s8, %s6
  %v10 = vstv %s1
  %v11 = vunpack.i.l.bf16 %v10
  %v13 = vunpack.i.h.bf16 %v10
  %v15 = vstv %s1
  %v16 = vunpack.i.l.bf16 %v15
  %v18 = vunpack.i.h.bf16 %v15
  %v20 = vstv %s4
  $region1: #{patch_embedding_pallas.2} parent=0
    #allocation17 [shape = 'u8[16384]{0}', space=vmem, size = 0x4000, scoped, tag = 'output window, operand 0']
    #allocation18 [shape = 's32[2]{0}', space=sflag, size = 0x8, scoped, tag = 'scoped memory for patch_embedding_pallas.2']
    %21 = vsyncpa [#allocation18], 0
    %s22 = scalar_lea.sflag [#allocation18], 1
    %23 = vsyncpa %s22, 0
    loop: start=0, step=1, limit=4
    $region2: #{patch_embedding_pallas.2} parent=1 // loop_pre_header
      _
    $region3: #{patch_embedding_pallas.2} parent=1 // loop_header
      %s25 = sphi 0, %s29
      %p26 = scmp.ge.s32.totalorder %s25, 4
      %s32 = sphi 0, %s44
      %s33 = sphi 0, %s40
      %s34 = sphi 0, %s32
      %s35 = sphi 0, %s33
      %s36 = sphi 0, %s34
      %s37 = sphi 0, %s35
      %s47 = sphi 0, %s49
      %s50 = sphi 0, %s47
      %s51 = sphi 0, %s50
      %s67 = sphi 0, %s51
      %s73 = sphi 0, %s75
      %s76 = sphi 0, %s73
      %s77 = sphi 0, %s76
      %s93 = sphi 0, %s77
      %s99 = sphi 0, %s101
      %s102 = sphi 0, %s99
      %s103 = sphi 0, %s102
      %s119 = sphi 0, %s103
      %s127 = sphi 0, %s129
      %s130 = sphi 0, %s127
      %s131 = sphi 0, %s130
      %s147 = sphi 0, %s131
    $region4: #{patch_embedding_pallas.2} parent=1 // loop_header_branch
      %28 = sbr.rel (%p26) target = $region8
    $region5: #{patch_embedding_pallas.2} parent=1 // loop_body
      %s30 = ssub.s32 %s25, 1
      %s31 = ssub.s32 %s25, 2
      %s38 = sadd.s32 1, %s33
      %p39 = scmp.ge.s32.totalorder %s38, 2
      %s40 = scalar_select %p39, 0, %s38
      %s41 = sadd.s32 1, %s32
      %s42 = scalar_select %p39, %s41, %s32
      %p43 = scmp.ge.s32.totalorder %s42, 1
      %s44 = scalar_select %p43, 0, %s42
      %s45 = ssub.s32 %s33, %s40
      %p46 = scmp.eq.s32.totalorder %s45, 0
      %s48 = sadd.s32 %s47, 1
      %s49 = scalar_select %p46, %s47, %s48
      %p52 = pneg %p46
      %p53 = scmp.eq.s32.totalorder %s25, 1
      %p54 = por %p52, %p53
      %p55 = scmp.ne.s32.totalorder %s47, %s50
      %p56 = scmp.eq.s32.totalorder %s25, 0
      %p57 = por %p55, %p56
      %p58 = scmp.ne.s32.totalorder %s47, %s50
      %p59 = scmp.eq.s32.totalorder %s30, 1
      %p60 = por %p58, %p59
      %p61 = scmp.ne.s32.totalorder %s50, %s51
      %p62 = scmp.eq.s32.totalorder %s30, 0
      %p63 = por %p61, %p62
      %p64 = scmp.ne.s32.totalorder %s50, %s51
      %p65 = scmp.eq.s32.totalorder %s31, 1
      %p66 = por %p64, %p65
      %p68 = scmp.ne.s32.totalorder %s51, %s67
      %p69 = scmp.eq.s32.totalorder %s31, 0
      %p70 = por %p68, %p69
      %s71 = ssub.s32 %s32, %s44
      %p72 = scmp.eq.s32.totalorder %s71, 0
      %s74 = sadd.s32 %s73, 1
      %s75 = scalar_select %p72, %s73, %s74
      %p78 = pneg %p72
      %p79 = scmp.eq.s32.totalorder %s25, 1
      %p80 = por %p78, %p79
      %p81 = scmp.ne.s32.totalorder %s73, %s76
      %p82 = scmp.eq.s32.totalorder %s25, 0
      %p83 = por %p81, %p82
      %p84 = scmp.ne.s32.totalorder %s73, %s76
      %p85 = scmp.eq.s32.totalorder %s30, 1
      %p86 = por %p84, %p85
      %p87 = scmp.ne.s32.totalorder %s76, %s77
      %p88 = scmp.eq.s32.totalorder %s30, 0
      %p89 = por %p87, %p88
      %p90 = scmp.ne.s32.totalorder %s76, %s77
      %p91 = scmp.eq.s32.totalorder %s31, 1
      %p92 = por %p90, %p91
      %p94 = scmp.ne.s32.totalorder %s77, %s93
      %p95 = scmp.eq.s32.totalorder %s31, 0
      %p96 = por %p94, %p95
      %s97 = ssub.s32 %s32, %s44
      %p98 = scmp.eq.s32.totalorder %s97, 0
      %s100 = sadd.s32 %s99, 1
      %s101 = scalar_select %p98, %s99, %s100
      %p104 = pneg %p98
      %p105 = scmp.eq.s32.totalorder %s25, 1
      %p106 = por %p104, %p105
      %p107 = scmp.ne.s32.totalorder %s99, %s102
      %p108 = scmp.eq.s32.totalorder %s25, 0
      %p109 = por %p107, %p108
      %p110 = scmp.ne.s32.totalorder %s99, %s102
      %p111 = scmp.eq.s32.totalorder %s30, 1
      %p112 = por %p110, %p111
      %p113 = scmp.ne.s32.totalorder %s102, %s103
      %p114 = scmp.eq.s32.totalorder %s30, 0
      %p115 = por %p113, %p114
      %p116 = scmp.ne.s32.totalorder %s102, %s103
      %p117 = scmp.eq.s32.totalorder %s31, 1
      %p118 = por %p116, %p117
      %p120 = scmp.ne.s32.totalorder %s103, %s119
      %p121 = scmp.eq.s32.totalorder %s31, 0
      %p122 = por %p120, %p121
      %s123 = ssub.s32 %s33, %s40
      %s124 = ssub.s32 %s32, %s44
      %s125 = sor.u32 %s123, %s124
      %p126 = scmp.eq.s32.totalorder %s125, 0
      %s128 = sadd.s32 %s127, 1
      %s129 = scalar_select %p126, %s127, %s128
      %p132 = pneg %p126
      %p133 = scmp.eq.s32.totalorder %s25, 1
      %p134 = por %p132, %p133
      %p135 = scmp.ne.s32.totalorder %s127, %s130
      %p136 = scmp.eq.s32.totalorder %s25, 0
      %p137 = por %p135, %p136
      %p138 = scmp.ne.s32.totalorder %s127, %s130
      %p139 = scmp.eq.s32.totalorder %s30, 1
      %p140 = por %p138, %p139
      %p141 = scmp.ne.s32.totalorder %s130, %s131
      %p142 = scmp.eq.s32.totalorder %s30, 0
      %p143 = por %p141, %p142
      %p144 = scmp.ne.s32.totalorder %s130, %s131
      %p145 = scmp.eq.s32.totalorder %s31, 1
      %p146 = por %p144, %p145
      %p148 = scmp.ne.s32.totalorder %s131, %s147
      %p149 = scmp.eq.s32.totalorder %s31, 0
      %p150 = por %p148, %p149
      %p151 = scmp.le.s32.totalorder 1, %s25
      %p152 = scmp.lt.s32.totalorder %s25, 3
      %p153 = pnand %p151, %p152
      %p154 = pneg %p153
      // Predicated region
      $region9: #{patch_embedding_pallas.2} parent=5 // pred_check
        _
      $region10: #{patch_embedding_pallas.2} parent=5 // pred_check_branch
        %156 = sbr.rel (%p153) target = $region12
      $region11: #{patch_embedding_pallas.2} parent=5 // pred_region
        %s157 = ssub.s32 %s25, 1
        // Predicated region
        $region13: #{patch_embedding_pallas.2} parent=11 // pred_check
          %p158 = pneg %p89
        $region14: #{patch_embedding_pallas.2} parent=11 // pred_check_branch
          %160 = sbr.rel (%p158) target = $region16
        $region15: #{patch_embedding_pallas.2} parent=11 // pred_region
          %s161 = ssub.s32 1, %s34
          %s162 = smul.u32 512, %s161
          %p163 = scmp.lt.s32.totalorder %s34, 0
          %s164 = scalar_select %p163, %s34, 0
          %s165 = smul.addr %s164, 4
          %s166 = scalar_lea.vmem %s0, %s165
          %s167 = ssub.s32 1, %s34
          %s168 = smul.u32 512, %s167
        $region16: #{patch_embedding_pallas.2} parent=11 // pred_fallthru
          _
        // Predicated region
        $region17: #{patch_embedding_pallas.2} parent=11 // pred_check
          %p169 = pneg %p115
        $region18: #{patch_embedding_pallas.2} parent=11 // pred_check_branch
          %171 = sbr.rel (%p169) target = $region20
        $region19: #{patch_embedding_pallas.2} parent=11 // pred_region
          %s172 = ssub.s32 1, %s34
          %s173 = smul.u32 16, %s172
          %p174 = scmp.lt.s32.totalorder %s34, 0
          %s175 = scalar_select %p174, %s34, 0
          %s176 = scalar_lea.vmem %s3, %s175
          %s177 = ssub.s32 1, %s34
          %s178 = smul.u32 16, %s177
        $region20: #{patch_embedding_pallas.2} parent=11 // pred_fallthru
          _
      $region12: #{patch_embedding_pallas.2} parent=5 // pred_fallthru
        _
      %p179 = scmp.lt.s32.totalorder %s25, 2
      // Predicated region
      $region21: #{patch_embedding_pallas.2} parent=5 // pred_check
        %p180 = pneg %p179
      $region22: #{patch_embedding_pallas.2} parent=5 // pred_check_branch
        %182 = sbr.rel (%p180) target = $region24
      $region23: #{patch_embedding_pallas.2} parent=5 // pred_region
        // Predicated region
        $region25: #{patch_embedding_pallas.2} parent=23 // pred_check
          %p183 = pneg %p57
        $region26: #{patch_embedding_pallas.2} parent=23 // pred_check_branch
          %185 = sbr.rel (%p183) target = $region28
        $region27: #{patch_embedding_pallas.2} parent=23 // pred_region
          %s186 = smul.u32 2, %s33
          %p187 = scmp.lt.s32.totalorder %s186, 3
          %s188 = scalar_select %p187, %s186, 3
          %s189 = smul.addr %s188, 4
          %s190 = scalar_lea.vmem %s2, %s189
          %s191 = smul.u32 2, %s33
        $region28: #{patch_embedding_pallas.2} parent=23 // pred_fallthru
          _
      $region24: #{patch_embedding_pallas.2} parent=5 // pred_fallthru
        _
      %p192 = scmp.le.s32.totalorder 1, %s25
      %p193 = scmp.lt.s32.totalorder %s25, 3
      %p194 = pnand %p192, %p193
      %p195 = pneg %p194
      // Predicated region
      $region29: #{patch_embedding_pallas.2} parent=5 // pred_check
        _
      $region30: #{patch_embedding_pallas.2} parent=5 // pred_check_branch
        %197 = sbr.rel (%p194) target = $region32
      $region31: #{patch_embedding_pallas.2} parent=5 // pred_region
        #allocation19 [shape = 'u8[4096]{0}', space=vmem, size = 0x1000, dematerialized = true, scoped, tag = 'FusionAdapter Buffer %fusion.2 = bf16[32,128]{1,0:T(8,128)(2,1)} fusion(%param_2.3, %param_1.5), kind=kLoop, calls=%fused_computation.3.clone, metadata={op_name="jit(patch_embedding_pallas)/jit(_pad)/pad" stack_frame_id=11}']
        #allocation20 [shape = 'u8[32768]{0}', space=vmem, size = 0x8000, dematerialized = true, scoped, tag = 'FusionAdapter Buffer %fusion.1 = bf16[128,128]{1,0:T(8,128)(2,1)} fusion(%param_0.6, %param_1.5), kind=kLoop, calls=%fused_computation.2.clone, metadata={op_name="jit(patch_embedding_pallas)/jit(_pad)/pad" stack_frame_id=15}']
        #allocation21 [shape = 'u8[512]{0}', space=vmem, size = 0x400, dematerialized = true, scoped, tag = 'FusionAdapter Buffer %fusion.3 = f32[1,128]{1,0:T(1,128)} fusion(%param_3.2, %param_4), kind=kLoop, calls=%fused_computation.4.clone, metadata={op_name="jit(patch_embedding_pallas)/jit(_pad)/pad" stack_frame_id=16}']
        %s198 = ssub.s32 %s25, 1
        %s199 = smul.u32 2, %s35
        %p200 = scmp.lt.s32.totalorder %s199, 3
        %s201 = scalar_select %p200, %s199, 3
        %s202 = smul.addr %s201, 4
        %s203 = scalar_lea.vmem %s2, %s202
        %p204 = pneg %p63
        %p205 = pneg %p60
        %s206 = ssub.s32 1, %s34
        %s207 = smul.u32 512, %s206
        %p208 = scmp.lt.s32.totalorder %s34, 0
        %s209 = scalar_select %p208, %s34, 0
        %s210 = smul.addr %s209, 4
        %s211 = scalar_lea.vmem %s0, %s210
        %p212 = pneg %p89
        %p213 = pneg %p86
        %s214 = ssub.s32 1, %s34
        %s215 = smul.u32 16, %s214
        %p216 = scmp.lt.s32.totalorder %s34, 0
        %s217 = scalar_select %p216, %s34, 0
        %s218 = scalar_lea.vmem %s3, %s217
        %p219 = pneg %p115
        %p220 = pneg %p112
        %p221 = pneg %p143
        %p222 = pneg %p140
        %s223 = sand.u32 %s130, 1
        %s224 = scalar_lea.sflag [#allocation18], %s223
        %s225 = sand.u32 %s130, 1
        %s226 = smul.addr %s225, 16
        %s227 = scalar_lea.vmem [#allocation17], %s226
        %s228 = smul.u32 2, %s35
        %p229 = scmp.lt.s32.totalorder %s228, 3
        %s230 = scalar_select %p229, %s228, 3
        %s231 = smul.addr %s230, 4
        %s232 = scalar_lea.vmem %s2, %s231
        %s233 = smul.u32 2, %s35
        %s234 = ssub.s32 1, %s34
        %s235 = smul.u32 512, %s234
        %p236 = scmp.lt.s32.totalorder %s34, 0
        %s237 = scalar_select %p236, %s34, 0
        %s238 = smul.addr %s237, 4
        %s239 = scalar_lea.vmem %s0, %s238
        %s240 = ssub.s32 1, %s34
        %s241 = smul.u32 512, %s240
        %s242 = ssub.s32 1, %s34
        %s243 = smul.u32 16, %s242
        %p244 = scmp.lt.s32.totalorder %s34, 0
        %s245 = scalar_select %p244, %s34, 0
        %s246 = scalar_lea.vmem %s3, %s245
        %s247 = ssub.s32 1, %s34
        %s248 = smul.u32 16, %s247
        %s249 = smul.u32 2, %s35
        %s251 = sor.u32 255, 127
        %s252 = sand.u32 %s251, 85
        %s253 = sshrl.u32 %s252, 1
        %s254 = sor.u32 %s252, %s253
        %s255 = sand.u32 51, %s254
        %s256 = sshrl.u32 %s255, 2
        %s257 = sor.u32 %s255, %s256
        %s258 = sand.u32 15, %s257
        %v259 = vld [vmem:[%s232] sm:%s258]
        %v260 = vunpack.c.l.bf16 %v259
        %v261 = vunpack.c.h.bf16 %v259
        %v262 = vlaneseq
        %v263 = vand.u32 %v262, 127
        %vm265 = vcmp.lt.s32.totalorder %v263, 64
        %v266 = vsel %vm265, %v260, %v11
        %v267 = vpack.c.bf16 0.0, %v266
        %269 = vst [vmem:[#allocation19] sm:$0xf] %v267
        %s270 = scalar_lea.vmem %s232, 4
        %s272 = sor.u32 255, 127
        %s273 = sand.u32 %s272, 85
        %s274 = sshrl.u32 %s273, 1
        %s275 = sor.u32 %s273, %s274
        %s276 = sand.u32 51, %s275
        %s277 = sshrl.u32 %s276, 2
        %s278 = sor.u32 %s276, %s277
        %s279 = sand.u32 15, %s278
        %v280 = vld [vmem:[%s270] sm:%s279]
        %v281 = vunpack.c.l.bf16 %v280
        %v282 = vunpack.c.h.bf16 %v280
        %v283 = vlaneseq
        %v284 = vand.u32 %v283, 127
        %vm286 = vcmp.lt.s32.totalorder %v284, 64
        %v287 = vsel %vm286, %v281, %v11
        %s288 = scalar_lea.vmem [#allocation19], 4
        %v289 = vpack.c.bf16 0.0, %v287
        %291 = vst [vmem:[%s288] sm:$0xf] %v289
        %s292 = ssub.s32 0, %s34
        %s293 = sor.u32 7, %s292
        %p294 = scmp.lt.s32.totalorder %s293, 0
        %s295 = scalar_select %p294, 0, 255
        %s296 = sshrl.u32 %s295, 1
        %s297 = sor.u32 %s295, %s296
        %s298 = sand.u32 %s297, 85
        %s299 = sshrl.u32 %s298, 1
        %s300 = sor.u32 %s298, %s299
        %s301 = sand.u32 51, %s300
        %s302 = sshrl.u32 %s301, 2
        %s303 = sor.u32 %s301, %s302
        %s304 = sand.u32 15, %s303
        %v305 = vld [vmem:[%s239] sm:%s304]
        %v306 = vunpack.c.l.bf16 %v305
        %v307 = vunpack.c.h.bf16 %v305
        %s308 = ssub.s32 0, %s34
        %s309 = sor.u32 7, %s308
        %v310 = vstv %s309
        %vm311 = vcmp.lt.s32.totalorder %v310, 0
        %v312 = vsel %vm311, %v16, %v306
        %s313 = smul.addr %s34, 128
        %v314 = vlaneseq
        %v315 = vand.u32 %v314, 127
        %v316 = vstv %s313
        %v317 = vadd.s32 %v315, %v316
        %vm318 = vcmp.lt.s32.totalorder %v317, 32
        %v319 = vsel %vm318, %v312, %v16
        %v320 = vpack.c.bf16 0.0, %v319
        %322 = vst [vmem:[#allocation20] sm:$0xf] %v320
        %s323 = scalar_lea.vmem %s239, 4
        %s324 = ssub.s32 0, %s34
        %s325 = sor.u32 6, %s324
        %p326 = scmp.lt.s32.totalorder %s325, 0
        %s327 = scalar_select %p326, 0, 255
        %s328 = sshrl.u32 %s327, 1
        %s329 = sor.u32 %s327, %s328
        %s330 = sand.u32 %s329, 85
        %s331 = sshrl.u32 %s330, 1
        %s332 = sor.u32 %s330, %s331
        %s333 = sand.u32 51, %s332
        %s334 = sshrl.u32 %s333, 2
        %s335 = sor.u32 %s333, %s334
        %s336 = sand.u32 15, %s335
        %v337 = vld [vmem:[%s323] sm:%s336]
        %v338 = vunpack.c.l.bf16 %v337
        %v339 = vunpack.c.h.bf16 %v337
        %s340 = ssub.s32 0, %s34
        %s341 = sor.u32 6, %s340
        %v342 = vstv %s341
        %vm343 = vcmp.lt.s32.totalorder %v342, 0
        %v344 = vsel %vm343, %v16, %v338
        %s345 = smul.addr %s34, 128
        %v346 = vlaneseq
        %v347 = vand.u32 %v346, 127
        %v348 = vstv %s345
        %v349 = vadd.s32 %v347, %v348
        %vm350 = vcmp.lt.s32.totalorder %v349, 32
        %v351 = vsel %vm350, %v344, %v16
        %s352 = scalar_lea.vmem [#allocation20], 4
        %v353 = vpack.c.bf16 0.0, %v351
        %355 = vst [vmem:[%s352] sm:$0xf] %v353
        %s356 = scalar_lea.vmem %s239, 8
        %s357 = ssub.s32 0, %s34
        %s358 = sor.u32 5, %s357
        %p359 = scmp.lt.s32.totalorder %s358, 0
        %s360 = scalar_select %p359, 0, 255
        %s361 = sshrl.u32 %s360, 1
        %s362 = sor.u32 %s360, %s361
        %s363 = sand.u32 %s362, 85
        %s364 = sshrl.u32 %s363, 1
        %s365 = sor.u32 %s363, %s364
        %s366 = sand.u32 51, %s365
        %s367 = sshrl.u32 %s366, 2
        %s368 = sor.u32 %s366, %s367
        %s369 = sand.u32 15, %s368
        %v370 = vld [vmem:[%s356] sm:%s369]
        %v371 = vunpack.c.l.bf16 %v370
        %v372 = vunpack.c.h.bf16 %v370
        %s373 = ssub.s32 0, %s34
        %s374 = sor.u32 5, %s373
        %v375 = vstv %s374
        %vm376 = vcmp.lt.s32.totalorder %v375, 0
        %v377 = vsel %vm376, %v16, %v371
        %s378 = smul.addr %s34, 128
        %v379 = vlaneseq
        %v380 = vand.u32 %v379, 127
        %v381 = vstv %s378
        %v382 = vadd.s32 %v380, %v381
        %vm383 = vcmp.lt.s32.totalorder %v382, 32
        %v384 = vsel %vm383, %v377, %v16
        %s385 = scalar_lea.vmem [#allocation20], 8
        %v386 = vpack.c.bf16 0.0, %v384
        %388 = vst [vmem:[%s385] sm:$0xf] %v386
        %s389 = scalar_lea.vmem %s239, 12
        %s390 = ssub.s32 0, %s34
        %s391 = sor.u32 4, %s390
        %p392 = scmp.lt.s32.totalorder %s391, 0
        %s393 = scalar_select %p392, 0, 255
        %s394 = sshrl.u32 %s393, 1
        %s395 = sor.u32 %s393, %s394
        %s396 = sand.u32 %s395, 85
        %s397 = sshrl.u32 %s396, 1
        %s398 = sor.u32 %s396, %s397
        %s399 = sand.u32 51, %s398
        %s400 = sshrl.u32 %s399, 2
        %s401 = sor.u32 %s399, %s400
        %s402 = sand.u32 15, %s401
        %v403 = vld [vmem:[%s389] sm:%s402]
        %v404 = vunpack.c.l.bf16 %v403
        %v405 = vunpack.c.h.bf16 %v403
        %s406 = ssub.s32 0, %s34
        %s407 = sor.u32 4, %s406
        %v408 = vstv %s407
        %vm409 = vcmp.lt.s32.totalorder %v408, 0
        %v410 = vsel %vm409, %v16, %v404
        %s411 = smul.addr %s34, 128
        %v412 = vlaneseq
        %v413 = vand.u32 %v412, 127
        %v414 = vstv %s411
        %v415 = vadd.s32 %v413, %v414
        %vm416 = vcmp.lt.s32.totalorder %v415, 32
        %v417 = vsel %vm416, %v410, %v16
        %s418 = scalar_lea.vmem [#allocation20], 12
        %v419 = vpack.c.bf16 0.0, %v417
        %421 = vst [vmem:[%s418] sm:$0xf] %v419
        %s422 = scalar_lea.vmem %s239, 16
        %s423 = ssub.s32 0, %s34
        %s424 = sor.u32 3, %s423
        %p425 = scmp.lt.s32.totalorder %s424, 0
        %s426 = scalar_select %p425, 0, 255
        %s427 = sshrl.u32 %s426, 1
        %s428 = sor.u32 %s426, %s427
        %s429 = sand.u32 %s428, 85
        %s430 = sshrl.u32 %s429, 1
        %s431 = sor.u32 %s429, %s430
        %s432 = sand.u32 51, %s431
        %s433 = sshrl.u32 %s432, 2
        %s434 = sor.u32 %s432, %s433
        %s435 = sand.u32 15, %s434
        %v436 = vld [vmem:[%s422] sm:%s435]
        %v437 = vunpack.c.l.bf16 %v436
        %v438 = vunpack.c.h.bf16 %v436
        %s439 = ssub.s32 0, %s34
        %s440 = sor.u32 3, %s439
        %v441 = vstv %s440
        %vm442 = vcmp.lt.s32.totalorder %v441, 0
        %v443 = vsel %vm442, %v16, %v437
        %s444 = smul.addr %s34, 128
        %v445 = vlaneseq
        %v446 = vand.u32 %v445, 127
        %v447 = vstv %s444
        %v448 = vadd.s32 %v446, %v447
        %vm449 = vcmp.lt.s32.totalorder %v448, 32
        %v450 = vsel %vm449, %v443, %v16
        %s451 = scalar_lea.vmem [#allocation20], 16
        %v452 = vpack.c.bf16 0.0, %v450
        %454 = vst [vmem:[%s451] sm:$0xf] %v452
        %s455 = scalar_lea.vmem %s239, 20
        %s456 = ssub.s32 0, %s34
        %s457 = sor.u32 2, %s456
        %p458 = scmp.lt.s32.totalorder %s457, 0
        %s459 = scalar_select %p458, 0, 255
        %s460 = sshrl.u32 %s459, 1
        %s461 = sor.u32 %s459, %s460
        %s462 = sand.u32 %s461, 85
        %s463 = sshrl.u32 %s462, 1
        %s464 = sor.u32 %s462, %s463
        %s465 = sand.u32 51, %s464
        %s466 = sshrl.u32 %s465, 2
        %s467 = sor.u32 %s465, %s466
        %s468 = sand.u32 15, %s467
        %v469 = vld [vmem:[%s455] sm:%s468]
        %v470 = vunpack.c.l.bf16 %v469
        %v471 = vunpack.c.h.bf16 %v469
        %s472 = ssub.s32 0, %s34
        %s473 = sor.u32 2, %s472
        %v474 = vstv %s473
        %vm475 = vcmp.lt.s32.totalorder %v474, 0
        %v476 = vsel %vm475, %v16, %v470
        %s477 = smul.addr %s34, 128
        %v478 = vlaneseq
        %v479 = vand.u32 %v478, 127
        %v480 = vstv %s477
        %v481 = vadd.s32 %v479, %v480
        %vm482 = vcmp.lt.s32.totalorder %v481, 32
        %v483 = vsel %vm482, %v476, %v16
        %s484 = scalar_lea.vmem [#allocation20], 20
        %v485 = vpack.c.bf16 0.0, %v483
        %487 = vst [vmem:[%s484] sm:$0xf] %v485
        %s488 = scalar_lea.vmem %s239, 24
        %s489 = ssub.s32 0, %s34
        %s490 = sor.u32 1, %s489
        %p491 = scmp.lt.s32.totalorder %s490, 0
        %s492 = scalar_select %p491, 0, 255
        %s493 = sshrl.u32 %s492, 1
        %s494 = sor.u32 %s492, %s493
        %s495 = sand.u32 %s494, 85
        %s496 = sshrl.u32 %s495, 1
        %s497 = sor.u32 %s495, %s496
        %s498 = sand.u32 51, %s497
        %s499 = sshrl.u32 %s498, 2
        %s500 = sor.u32 %s498, %s499
        %s501 = sand.u32 15, %s500
        %v502 = vld [vmem:[%s488] sm:%s501]
        %v503 = vunpack.c.l.bf16 %v502
        %v504 = vunpack.c.h.bf16 %v502
        %s505 = ssub.s32 0, %s34
        %s506 = sor.u32 1, %s505
        %v507 = vstv %s506
        %vm508 = vcmp.lt.s32.totalorder %v507, 0
        %v509 = vsel %vm508, %v16, %v503
        %s510 = smul.addr %s34, 128
        %v511 = vlaneseq
        %v512 = vand.u32 %v511, 127
        %v513 = vstv %s510
        %v514 = vadd.s32 %v512, %v513
        %vm515 = vcmp.lt.s32.totalorder %v514, 32
        %v516 = vsel %vm515, %v509, %v16
        %s517 = scalar_lea.vmem [#allocation20], 24
        %v518 = vpack.c.bf16 0.0, %v516
        %520 = vst [vmem:[%s517] sm:$0xf] %v518
        %s521 = scalar_lea.vmem %s239, 28
        %s522 = ssub.s32 0, %s34
        %p523 = scmp.lt.s32.totalorder %s522, 0
        %s524 = scalar_select %p523, 0, 255
        %s525 = sshrl.u32 %s524, 1
        %s526 = sor.u32 %s524, %s525
        %s527 = sand.u32 %s526, 85
        %s528 = sshrl.u32 %s527, 1
        %s529 = sor.u32 %s527, %s528
        %s530 = sand.u32 51, %s529
        %s531 = sshrl.u32 %s530, 2
        %s532 = sor.u32 %s530, %s531
        %s533 = sand.u32 15, %s532
        %v534 = vld [vmem:[%s521] sm:%s533]
        %v535 = vunpack.c.l.bf16 %v534
        %v536 = vunpack.c.h.bf16 %v534
        %s537 = ssub.s32 0, %s34
        %v538 = vstv %s537
        %vm539 = vcmp.lt.s32.totalorder %v538, 0
        %v540 = vsel %vm539, %v16, %v535
        %s541 = smul.addr %s34, 128
        %v542 = vlaneseq
        %v543 = vand.u32 %v542, 127
        %v544 = vstv %s541
        %v545 = vadd.s32 %v543, %v544
        %vm546 = vcmp.lt.s32.totalorder %v545, 32
        %v547 = vsel %vm546, %v540, %v16
        %s548 = scalar_lea.vmem [#allocation20], 28
        %v549 = vpack.c.bf16 0.0, %v547
        %551 = vst [vmem:[%s548] sm:$0xf] %v549
        %s552 = scalar_lea.vmem [#allocation20], 32
        %v553 = vpack.c.bf16 0.0, %v16
        %555 = vst [vmem:[%s552] sm:$0xf] %v553
        %s556 = scalar_lea.vmem [#allocation20], 36
        %v557 = vpack.c.bf16 0.0, %v16
        %559 = vst [vmem:[%s556] sm:$0xf] %v557
        %s560 = scalar_lea.vmem [#allocation20], 40
        %v561 = vpack.c.bf16 0.0, %v16
        %563 = vst [vmem:[%s560] sm:$0xf] %v561
        %s564 = scalar_lea.vmem [#allocation20], 44
        %v565 = vpack.c.bf16 0.0, %v16
        %567 = vst [vmem:[%s564] sm:$0xf] %v565
        %s568 = scalar_lea.vmem [#allocation20], 48
        %v569 = vpack.c.bf16 0.0, %v16
        %571 = vst [vmem:[%s568] sm:$0xf] %v569
        %s572 = scalar_lea.vmem [#allocation20], 52
        %v573 = vpack.c.bf16 0.0, %v16
        %575 = vst [vmem:[%s572] sm:$0xf] %v573
        %s576 = scalar_lea.vmem [#allocation20], 56
        %v577 = vpack.c.bf16 0.0, %v16
        %579 = vst [vmem:[%s576] sm:$0xf] %v577
        %s580 = scalar_lea.vmem [#allocation20], 60
        %v581 = vpack.c.bf16 0.0, %v16
        %583 = vst [vmem:[%s580] sm:$0xf] %v581
        %s584 = ssub.s32 0, %s34
        %p585 = scmp.lt.s32.totalorder %s584, 0
        %s586 = scalar_select %p585, 0, 255
        %s587 = sand.u32 1, %s586
        %s588 = sand.u32 1, %s587
        %v589 = vld [vmem:[%s246] sm:%s588]
        %s590 = ssub.s32 0, %s34
        %v591 = vstv %s590
        %vm592 = vcmp.lt.s32.totalorder %v591, 0
        %v593 = vsel %vm592, %v20, %v589
        %v594 = vlaneseq
        %v595 = vshrl.u32 %v594, 7
        %vm597 = vcmp.lt.s32.totalorder %v595, 1
        %v598 = vsel %vm597, %v593, %v20
        %s599 = smul.addr %s34, 128
        %v600 = vlaneseq
        %v601 = vand.u32 %v600, 127
        %v602 = vstv %s599
        %v603 = vadd.s32 %v601, %v602
        %vm604 = vcmp.lt.s32.totalorder %v603, 32
        %v605 = vsel %vm604, %v598, %v20
        %607 = vst [vmem:[#allocation21] sm:$0x1] %v605
        %v609 = vld [vmem:[#allocation19] sm:$0xf]
        %v610 = vld [vmem:[#allocation19 + $0x4] sm:$0xf]
        %v611 = vld [vmem:[#allocation20] sm:$0xf]
        %v612 = vld [vmem:[#allocation20 + $0x4] sm:$0xf]
        %v613 = vld [vmem:[#allocation20 + $0x8] sm:$0xf]
        %v614 = vld [vmem:[#allocation20 + $0xc] sm:$0xf]
        %v615 = vld [vmem:[#allocation20 + $0x10] sm:$0xf]
        %v616 = vld [vmem:[#allocation20 + $0x14] sm:$0xf]
        %v617 = vld [vmem:[#allocation20 + $0x18] sm:$0xf]
        %v618 = vld [vmem:[#allocation20 + $0x1c] sm:$0xf]
        %v619 = vld [vmem:[#allocation20 + $0x20] sm:$0xf]
        %v620 = vld [vmem:[#allocation20 + $0x24] sm:$0xf]
        %v621 = vld [vmem:[#allocation20 + $0x28] sm:$0xf]
        %v622 = vld [vmem:[#allocation20 + $0x2c] sm:$0xf]
        %v623 = vld [vmem:[#allocation20 + $0x30] sm:$0xf]
        %v624 = vld [vmem:[#allocation20 + $0x34] sm:$0xf]
        %v625 = vld [vmem:[#allocation20 + $0x38] sm:$0xf]
        %v626 = vld [vmem:[#allocation20 + $0x3c] sm:$0xf]
        %v627 = vld [vmem:[#allocation21] sm:$0x1]
        %v629 = vlaneseq
        %v630 = vshrl.u32 %v629, 7
        %v631 = vsub.s32 0, %v630
        %v632 = vrot.slane %v627, %v631
        %v636 = vunpack.c.l.b16 %v609
        %v637 = vunpack.c.l.b16 %v610
        %v638 = vpack.c.b16 %v637, %v636
        %v656 = vunpack.c.l.b16 %v611
        %v657 = vunpack.c.l.b16 %v612
        %v658 = vunpack.c.l.b16 %v613
        %v659 = vunpack.c.l.b16 %v614
        %v660 = vunpack.c.l.b16 %v615
        %v661 = vunpack.c.l.b16 %v616
        %v662 = vunpack.c.l.b16 %v617
        %v663 = vunpack.c.l.b16 %v618
        %v664 = vunpack.c.l.b16 %v619
        %v665 = vunpack.c.l.b16 %v620
        %v666 = vunpack.c.l.b16 %v621
        %v667 = vunpack.c.l.b16 %v622
        %v668 = vunpack.c.l.b16 %v623
        %v669 = vunpack.c.l.b16 %v624
        %v670 = vunpack.c.l.b16 %v625
        %v671 = vunpack.c.l.b16 %v626
        %v672 = vpack.c.b16 %v657, %v656
        %v673 = vpack.c.b16 %v659, %v658
        %v674 = vpack.c.b16 %v661, %v660
        %v675 = vpack.c.b16 %v663, %v662
        %v676 = vpack.c.b16 %v665, %v664
        %v677 = vpack.c.b16 %v667, %v666
        %v678 = vpack.c.b16 %v669, %v668
        %v679 = vpack.c.b16 %v671, %v670
        %688 = vmatprep.subr.bf16.mxu0 0
        %689 = vmatpush1.bf16.msra.mxu0 %v672
        %690 = vmatprep.subr.bf16.mxu0 0
        %691 = vmatpush1.bf16.msra.mxu0 %v673
        %692 = vmatprep.subr.bf16.mxu0 0
        %693 = vmatpush1.bf16.msra.mxu0 %v674
        %694 = vmatprep.subr.bf16.mxu0 0
        %695 = vmatpush1.bf16.msra.mxu0 %v675
        %696 = vmatprep.subr.bf16.mxu0 0
        %697 = vmatpush1.bf16.msra.mxu0 %v676
        %698 = vmatprep.subr.bf16.mxu0 0
        %699 = vmatpush1.bf16.msra.mxu0 %v677
        %700 = vmatprep.subr.bf16.mxu0 0
        %701 = vmatpush1.bf16.msra.mxu0 %v678
        %702 = vmatprep.subr.bf16.mxu0 0
        %703 = vmatpush1.bf16.msra.mxu0 %v679
        %704 = vmatprep.subr.bf16.mxu0 0
        %705 = vmatpush1.bf16.msra.mxu0 0
        %706 = vmatprep.subr.bf16.mxu0 0
        %707 = vmatpush1.bf16.msra.mxu0 0
        %708 = vmatprep.subr.bf16.mxu0 0
        %709 = vmatpush1.bf16.msra.mxu0 0
        %710 = vmatprep.subr.bf16.mxu0 0
        %711 = vmatpush1.bf16.msra.mxu0 0
        %712 = vmatprep.subr.bf16.mxu0 0
        %713 = vmatpush1.bf16.msra.mxu0 0
        %714 = vmatprep.subr.bf16.mxu0 0
        %715 = vmatpush1.bf16.msra.mxu0 0
        %716 = vmatprep.subr.bf16.mxu0 0
        %717 = vmatpush1.bf16.msra.mxu0 0
        %718 = vmatprep.subr.bf16.mxu0 0
        %719 = vmatpush1.bf16.msra.mxu0 0
        %720 = vmatprep.mubr.bf16.mxu0 0
        %721 = vmatmul.mubr.bf16.gmra.mrb[0].mxu0 %v638
        %v722 = vpop.f32.mrb[0].mxu0
        %v723 = vadd.f32 %v632, %v722
        %v724 = vpop.f32.mrb[0].mxu0
        %v725 = vpop.f32.mrb[0].mxu0
        %v726 = vadd.f32 %v632, %v725
        %v727 = vpop.f32.mrb[0].mxu0
        %728 = vdwg.mxu0
        %729 = vst [vmem:[%s227] sm:$0xff] %v723
        %730 = vst [vmem:[%s227 + $0x8] sm:$0xff] %v726
        %s731 = sand.u32 %s130, 1
        %s732 = scalar_lea.sflag [#allocation18], %s731
        %s733 = sand.u32 %s130, 1
        %s734 = smul.addr %s733, 16
        %s735 = scalar_lea.vmem [#allocation17], %s734
        // Predicated region
        $region33: #{patch_embedding_pallas.2} parent=31 // pred_check
          %p736 = pneg %p140
        $region34: #{patch_embedding_pallas.2} parent=31 // pred_check_branch
          %738 = sbr.rel (%p736) target = $region36
        $region35: #{patch_embedding_pallas.2} parent=31 // pred_region
          %s739 = smul.u32 2, %s35
          %s741 = ssub.s32 256, 256
          %742 = vsyncadd %s732, %s741
          %s743 = sadd.s32 %s34, %s739
          %s744 = smul.addr %s743, 128
          %s745 = scalar_lea.hbm %s5, %s744
          %s746 = sshll.u32 %s735, 4
          %s747 = int_to_ptr.vmem [resolvable:$true] %s746
          %752 = dma.vmem_to_hbm [thread:$0]  %s747, 256, %s745, %s732, 128, 128, 8
        $region36: #{patch_embedding_pallas.2} parent=31 // pred_fallthru
          _
      $region32: #{patch_embedding_pallas.2} parent=5 // pred_fallthru
        _
      %p753 = scmp.le.s32.totalorder 2, %s25
      // Predicated region
      $region37: #{patch_embedding_pallas.2} parent=5 // pred_check
        %p754 = pneg %p753
      $region38: #{patch_embedding_pallas.2} parent=5 // pred_check_branch
        %756 = sbr.rel (%p754) target = $region40
      $region39: #{patch_embedding_pallas.2} parent=5 // pred_region
        %s757 = ssub.s32 %s25, 2
        // Predicated region
        $region41: #{patch_embedding_pallas.2} parent=39 // pred_check
          %p758 = pneg %p146
        $region42: #{patch_embedding_pallas.2} parent=39 // pred_check_branch
          %760 = sbr.rel (%p758) target = $region44
        $region43: #{patch_embedding_pallas.2} parent=39 // pred_region
          %s761 = sand.u32 %s131, 1
          %s762 = scalar_lea.sflag [#allocation18], %s761
          %s763 = sand.u32 %s131, 1
          %s764 = smul.addr %s763, 16
          %s765 = scalar_lea.vmem [#allocation17], %s764
          %766 = dma.done %s762, 256
        $region44: #{patch_embedding_pallas.2} parent=39 // pred_fallthru
          _
      $region40: #{patch_embedding_pallas.2} parent=5 // pred_fallthru
        _
    $region6: #{patch_embedding_pallas.2} parent=1 // loop_footer
      %s29 = sadd.s32 1, %s25
    $region7: #{patch_embedding_pallas.2} parent=1 // loop_footer_branch
      %24 = sbr.rel target = $region3
    $region8: #{patch_embedding_pallas.2} parent=1 // loop_exit
      _
    %767 = vsyncpa [#allocation18], 1
    %s768 = scalar_lea.sflag [#allocation18], 1
    %769 = vsyncpa %s768, 1

</llo_original>
